<compile_context>
chip_gen: v7x
topology: tpu7x:2x2x1
jax: 0.10.0
libtpu: 0.0.40
codegen_flags: <defaults>
</compile_context>

<pallas_src>
import functools

import jax
import jax.numpy as jnp
from jax.experimental import pallas as pl
from jax.experimental.pallas import tpu as pltpu


# ----------------------------------------------------------------------------
# Fused kernel (Nb batch images per grid step, spatial dims flattened)
# ----------------------------------------------------------------------------
def _bottleneck_kernel(x_ref, w1_ref, b1_ref, w2_ref, b2_ref, m_ref, o_ref,
                       *scratch, H, W, matmul_dtype, conv2_accumulate,
                       early_cast):
    # x_ref : (Nb, Cin, HW)       input pixels (NCHW, spatial flattened)
    # w1_ref: (C1, Cin)           1x1 conv weight, BN1 scale folded in
    # w2_ref: (Cout, 9*C1)  [staged]  or  (9, Cout, C1)  [accumulate]
    # b1_ref: (C1, 1)  b2_ref: (Cout, 1)   folded BN biases (f32)
    # m_ref : (9, 1, HW)          per-tap validity masks (implicit zero pad)
    # o_ref : (Nb, Cin+Cout, HW)  output = concat([x, h2], channel axis)
    Nb, Cin, HW = x_ref.shape
    C1 = w1_ref.shape[0]
    Cout = b2_ref.shape[0]
    roll_dtype = matmul_dtype if early_cast else jnp.float32

    for nb in range(Nb):                     # static unroll over this block
        x = x_ref[nb]                                      # (Cin, HW)
        # DenseNet concat, part 1: exact passthrough copy of x.
        # (Masked partial store at Cin=4 sublanes; pad channels to a multiple
        #  of 8 at the block level if the consumer allows.)
        o_ref[nb, :Cin, :] = x.astype(o_ref.dtype)

        # --- conv1 (1x1) + folded BN1 + ReLU: (C1,Cin) @ (Cin,HW) -----------
        h1 = jnp.dot(w1_ref[...], x.astype(matmul_dtype),
                     preferred_element_type=jnp.float32)
        h1 = jnp.maximum(h1 + b1_ref[...], 0.0)            # (C1, HW) f32
        # TODO(synk): dropout(p=0.2) would go here in training mode.
        h1 = h1.astype(roll_dtype)          # early bf16 cast on v6e/v7x only

        # --- conv2 (3x3, pad=1): roll-based im2col taps ----------------------
        # Tap (dh,dw) needs h1 shifted by d=(dh-1)*W+(dw-1) in the flattened
        # spatial index; a circular lane-rotate (XLU) plus a border mask
        # reproduces the zero-padded shift.  Only ONE tap is live at a time.
        def make_tap(t):
            dh, dw = t // 3, t % 3
            d = (dh - 1) * W + (dw - 1)
            s = h1 if d == 0 else pltpu.roll(h1, shift=(-d) % HW, axis=1)
            if t != 4:                       # center tap: mask is all ones
                s = s * m_ref[t]
            return s

        if conv2_accumulate:
            # v7x-friendly: 9 accumulating K=C1 dots (MRB in-place acc),
            # no (9*C1, HW) slab, no tap staging stores.
            h2 = jnp.zeros((Cout, HW), jnp.float32)
            for t in range(9):
                h2 += jnp.dot(w2_ref[t], make_tap(t).astype(matmul_dtype),
                              preferred_element_type=jnp.float32)
        else:
            # v5e/v6e-friendly: stream each tap into VMEM scratch at a static
            # sublane offset, then ONE K=9*C1 MXU matmul (no vreg spills, no
            # concat relayout).
            pat_ref = scratch[0]                            # (9*C1, HW)
            for t in range(9):
                pat_ref[t * C1:(t + 1) * C1, :] = make_tap(t).astype(matmul_dtype)
            h2 = jnp.dot(w2_ref[...], pat_ref[...],
                         preferred_element_type=jnp.float32)

        h2 = jnp.maximum(h2 + b2_ref[...], 0.0)             # (Cout, HW) f32
        # TODO(synk): dropout(p=0.2) would go here in training mode.

        # DenseNet concat, part 2
        o_ref[nb, Cin:, :] = h2.astype(o_ref.dtype)


# ----------------------------------------------------------------------------
# Wrapper: fold BN into weights, build border masks, launch fused kernel
# ----------------------------------------------------------------------------
def _fold_bn(gamma, beta, mean, var, eps=1e-5):
    s = gamma / jnp.sqrt(var + eps)
    return s, beta - mean * s


def _tap_masks(H, W):
    p = jnp.arange(H * W, dtype=jnp.int32)
    h, w = p // W, p % W
    masks = []
    for dh in range(3):
        for dw in range(3):
            oh, ow = dh - 1, dw - 1
            ok = (h + oh >= 0) & (h + oh < H) & (w + ow >= 0) & (w + ow < W)
            masks.append(ok.astype(jnp.float32))
    return jnp.stack(masks).reshape(9, 1, H * W)


def bottleneck_forward(x_nchw, params, *, use_dropout=False,
                       matmul_dtype=jnp.float32, conv2_accumulate=False,
                       early_cast=False, images_per_step=1):
    """Fused Pallas implementation of _Bottleneck.forward (eval mode, NCHW).

    conv2_accumulate : use 9 accumulating K=C1 dots (recommended on v7x)
                       instead of the staged single K=9*C1 matmul (v5e/v6e).
    early_cast       : run rolls / mask-muls in matmul_dtype (recommended for
                       bf16 on v6e/v7x; keep False on v5e — no bf16 VPU).
    images_per_step  : batch images per grid step (amortizes per-step
                       overhead / DMA setup); must divide N.
    """
    del use_dropout  # TODO(synk): training-mode dropout not implemented
    N, Cin, H, W = x_nchw.shape
    HW = H * W
    Nb = images_per_step
    assert N % Nb == 0, (N, Nb)

    w1 = params["w1"]                      # (C1, Cin)  == PyTorch (C1,Cin,1,1)
    w2 = params["w2"]                      # (Cout, C1, 3, 3)  PyTorch OIHW
    C1, Cout = w1.shape[0], w2.shape[0]

    s1, b1 = _fold_bn(params["bn1_gamma"], params["bn1_beta"],
                      params["bn1_mean"], params["bn1_var"])
    s2, b2 = _fold_bn(params["bn2_gamma"], params["bn2_beta"],
                      params["bn2_mean"], params["bn2_var"])

    # Fold BN scales into the conv weights; conv2 weight layout matches the
    # kernel's tap order (t = kh*3 + kw, channel innermost).
    w1s = (w1 * s1[:, None]).astype(matmul_dtype)                   # (C1, Cin)
    w2_scaled = w2 * s2[:, None, None, None]
    if conv2_accumulate:
        w2k = jnp.transpose(w2_scaled, (2, 3, 0, 1)).reshape(
            9, Cout, C1).astype(matmul_dtype)                       # (9,Cout,C1)
        w2_spec = pl.BlockSpec((9, Cout, C1), lambda n: (0, 0, 0))
        scratch_shapes = []
    else:
        w2k = jnp.transpose(w2_scaled, (0, 2, 3, 1)).reshape(
            Cout, 9 * C1).astype(matmul_dtype)                      # (Cout,9C1)
        w2_spec = pl.BlockSpec((Cout, 9 * C1), lambda n: (0, 0))
        scratch_shapes = [pltpu.VMEM((9 * C1, HW), matmul_dtype)]
    b1c = b1.reshape(C1, 1).astype(jnp.float32)
    b2c = b2.reshape(Cout, 1).astype(jnp.float32)

    roll_dtype = matmul_dtype if early_cast else jnp.float32
    masks = _tap_masks(H, W).astype(roll_dtype)

    x_flat = x_nchw.reshape(N, Cin, HW)    # contiguous flatten, no transpose
    # TODO(synk): pass activations as bf16 end-to-end (or alias the block
    # buffer) to actually halve activation DMA bytes in the bf16 path.

    out = pl.pallas_call(
        functools.partial(_bottleneck_kernel, H=H, W=W,
                          matmul_dtype=matmul_dtype,
                          conv2_accumulate=conv2_accumulate,
                          early_cast=early_cast),
        out_shape=jax.ShapeDtypeStruct((N, Cin + Cout, HW), x_nchw.dtype),
        grid=(N // Nb,),
        in_specs=[
            pl.BlockSpec((Nb, Cin, HW), lambda n: (n, 0, 0)),
            pl.BlockSpec((C1, Cin), lambda n: (0, 0)),
            pl.BlockSpec((C1, 1), lambda n: (0, 0)),
            w2_spec,
            pl.BlockSpec((Cout, 1), lambda n: (0, 0)),
            pl.BlockSpec((9, 1, HW), lambda n: (0, 0, 0)),
        ],
        out_specs=pl.BlockSpec((Nb, Cin + Cout, HW), lambda n: (n, 0, 0)),
        scratch_shapes=scratch_shapes,
        compiler_params=pltpu.CompilerParams(
            dimension_semantics=("parallel",)),
    )(x_flat, w1s, b1c, w2k, b2c, masks)
    # TODO(synk): for large H*W / Cin (deeper DenseNet layers) tile the
    # spatial axis with a 1-row halo (lane tile multiple of 128) and budget
    # VMEM against v7x's 64 MiB (set vmem_limit_bytes explicitly).
    return out.reshape(N, Cin + Cout, H, W)


# ----------------------------------------------------------------------------
# Pure-JAX reference for correctness
# ----------------------------------------------------------------------------
def bottleneck_reference(x_nchw, params):
    s1, b1 = _fold_bn(params["bn1_gamma"], params["bn1_beta"],
                      params["bn1_mean"], params["bn1_var"])
    s2, b2 = _fold_bn(params["bn2_gamma"], params["bn2_beta"],
                      params["bn2_mean"], params["bn2_var"])
    h = jnp.einsum("oc,nchw->nohw", params["w1"], x_nchw)
    h = jnp.maximum(h * s1[None, :, None, None] + b1[None, :, None, None], 0.0)
    h2 = jax.lax.conv_general_dilated(
        h, params["w2"], window_strides=(1, 1), padding="SAME",
        dimension_numbers=("NCHW", "OIHW", "NCHW"))
    h2 = jnp.maximum(h2 * s2[None, :, None, None] + b2[None, :, None, None], 0.0)
    return jnp.concatenate([x_nchw, h2], axis=1)


# ----------------------------------------------------------------------------
if __name__ == "__main__":
    key = jax.random.PRNGKey(0)
    ks = jax.random.split(key, 12)

    # module hyper-params (small, consistent with the PyTorch module)
    n_channels, growth_rate, H, W = 4, 16, 16, 16
    growth_rate = 8
    inter_c = 4 * growth_rate  # 32

    params = {
        # conv1: PyTorch weight (inter_c, n_channels, 1, 1) squeezed to 2-D
        "w1": 0.2 * jax.random.normal(ks[1], (inter_c, n_channels), jnp.float32),
        # conv2: PyTorch OIHW weight (growth_rate, inter_c, 3, 3)
        "w2": 0.1 * jax.random.normal(ks[2], (growth_rate, inter_c, 3, 3),
                                      jnp.float32),
        "bn1_gamma": 1.0 + 0.1 * jax.random.normal(ks[3], (inter_c,), jnp.float32),
        "bn1_beta": 0.1 * jax.random.normal(ks[4], (inter_c,), jnp.float32),
        "bn1_mean": 0.1 * jax.random.normal(ks[5], (inter_c,), jnp.float32),
        "bn1_var": jnp.abs(jax.random.normal(ks[6], (inter_c,), jnp.float32)) + 0.5,
        "bn2_gamma": 1.0 + 0.1 * jax.random.normal(ks[7], (growth_rate,), jnp.float32),
        "bn2_beta": 0.1 * jax.random.normal(ks[8], (growth_rate,), jnp.float32),
        "bn2_mean": 0.1 * jax.random.normal(ks[9], (growth_rate,), jnp.float32),
        "bn2_var": jnp.abs(jax.random.normal(ks[10], (growth_rate,), jnp.float32)) + 0.5,
    }

    # ---- N=2, one image per grid step (grid=(2,)) ---------------------------
    x2 = jax.random.normal(ks[0], (2, n_channels, H, W), jnp.float32)
    ref2 = bottleneck_reference(x2, params)

    # f32, staged im2col (v5e/v6e default)
    out = jax.block_until_ready(
        jax.jit(functools.partial(bottleneck_forward))(x2, params))
    assert out.shape == (2, n_channels + growth_rate, H, W), out.shape
    assert jnp.allclose(out, ref2, atol=1e-3, rtol=1e-3), \
        float(jnp.max(jnp.abs(out - ref2)))

    # f32, accumulating-dots form (v7x-friendly, no im2col slab)
    out_acc = jax.block_until_ready(
        jax.jit(functools.partial(bottleneck_forward,
                                  conv2_accumulate=True))(x2, params))
    assert jnp.allclose(out_acc, ref2, atol=1e-3, rtol=1e-3), \
        float(jnp.max(jnp.abs(out_acc - ref2)))

    # bf16 matmul operands with early cast (v6e/v7x recipe); f32 accumulate,
    # exact f32 x passthrough; looser tolerance.
    out_bf16 = jax.block_until_ready(
        jax.jit(functools.partial(bottleneck_forward,
                                  matmul_dtype=jnp.bfloat16,
                                  early_cast=True))(x2, params))
    assert jnp.allclose(out_bf16, ref2, atol=1e-1, rtol=1e-1), \
        float(jnp.max(jnp.abs(out_bf16 - ref2)))

    # ---- N=4, two images per grid step (grid=(2,), bigger blocks) -----------
    x4 = jax.random.normal(ks[11], (4, n_channels, H, W), jnp.float32)
    ref4 = bottleneck_reference(x4, params)
    out4 = jax.block_until_ready(
        jax.jit(functools.partial(bottleneck_forward,
                                  images_per_step=2))(x4, params))
    assert out4.shape == (4, n_channels + growth_rate, H, W), out4.shape
    assert jnp.allclose(out4, ref4, atol=1e-3, rtol=1e-3), \
        float(jnp.max(jnp.abs(out4 - ref4)))

    print("KERNEL_OK")
</pallas_src>

<mosaic_0001>
module attributes {stable_mosaic.version = 11 : i64} {
  func.func @_bottleneck_kernel(%arg0: i32, %arg1: memref<1x4x256xf32, #tpu.memory_space<vmem>>, %arg2: memref<32x4xf32, #tpu.memory_space<vmem>>, %arg3: memref<32x1xf32, #tpu.memory_space<vmem>>, %arg4: memref<8x288xf32, #tpu.memory_space<vmem>>, %arg5: memref<8x1xf32, #tpu.memory_space<vmem>>, %arg6: memref<9x1x256xf32, #tpu.memory_space<vmem>>, %arg7: memref<1x12x256xf32, #tpu.memory_space<vmem>>, %arg8: memref<288x256xf32, #tpu.memory_space<vmem>>) attributes {dimension_semantics = [#tpu.dimension_semantics<parallel>], iteration_bounds = array<i64: 2>, scalar_prefetch = 0 : i64, scratch_operands = 1 : i64, tpu.core_type = #tpu.core_type<tc>, window_params = [{transform_indices = @transform_0, window_bounds = array<i64: 1, 4, 256>}, {pipeline_mode = #tpu.pipeline_mode<synchronous>, transform_indices = @transform_1, window_bounds = array<i64: 32, 4>}, {pipeline_mode = #tpu.pipeline_mode<synchronous>, transform_indices = @transform_2, window_bounds = array<i64: 32, 1>}, {pipeline_mode = #tpu.pipeline_mode<synchronous>, transform_indices = @transform_3, window_bounds = array<i64: 8, 288>}, {pipeline_mode = #tpu.pipeline_mode<synchronous>, transform_indices = @transform_4, window_bounds = array<i64: 8, 1>}, {pipeline_mode = #tpu.pipeline_mode<synchronous>, transform_indices = @transform_5, window_bounds = array<i64: 9, 1, 256>}, {transform_indices = @transform_6, window_bounds = array<i64: 1, 12, 256>}]} {
    %c0 = arith.constant 0 : index
    %c0_0 = arith.constant 0 : index
    %c0_1 = arith.constant 0 : index
    %0 = vector.load %arg1[%c0, %c0_0, %c0_1] : memref<1x4x256xf32, #tpu.memory_space<vmem>>, vector<1x4x256xf32>
    %1 = vector.shape_cast %0 : vector<1x4x256xf32> to vector<4x256xf32>
    %c0_2 = arith.constant 0 : index
    %c0_3 = arith.constant 0 : index
    %c0_4 = arith.constant 0 : index
    %2 = vector.load %arg7[%c0_2, %c0_3, %c0_4] : memref<1x12x256xf32, #tpu.memory_space<vmem>>, vector<1x4x256xf32>
    %3 = vector.shape_cast %2 : vector<1x4x256xf32> to vector<4x256xf32>
    %4 = vector.shape_cast %1 : vector<4x256xf32> to vector<1x4x256xf32>
    tpu.vector_store %arg7[%c0_2, %c0_3, %c0_4], %4 {strides = array<i32>} : memref<1x12x256xf32, #tpu.memory_space<vmem>>, vector<1x4x256xf32>,
    %c0_5 = arith.constant 0 : index
    %c0_6 = arith.constant 0 : index
    %5 = vector.load %arg2[%c0_5, %c0_6] : memref<32x4xf32, #tpu.memory_space<vmem>>, vector<32x4xf32>
    %cst = arith.constant dense<0.000000e+00> : vector<32x256xf32>
    %6 = tpu.matmul %5, %1, %cst {dimension_numbers = #tpu.dot_dimension_numbers<[1], [0], [0], [1], [0, 0, 1, 1], [], []>} : vector<32x4xf32>, vector<4x256xf32>, vector<32x256xf32> -> vector<32x256xf32>
    %c0_7 = arith.constant 0 : index
    %c0_8 = arith.constant 0 : index
    %7 = vector.load %arg3[%c0_7, %c0_8] : memref<32x1xf32, #tpu.memory_space<vmem>>, vector<32x1xf32>
    %8 = vector.broadcast %7 : vector<32x1xf32> to vector<32x256xf32>
    %9 = arith.addf %6, %8 : vector<32x256xf32>
    %cst_9 = arith.constant 0.000000e+00 : f32
    %10 = vector.broadcast %cst_9 : f32 to vector<32x256xf32>
    %11 = arith.maximumf %9, %10 : vector<32x256xf32>
    %c17_i32 = arith.constant 17 : i32
    %12 = tpu.dynamic_rotate %11 by %c17_i32 dim 1 : vector<32x256xf32>, i32 -> vector<32x256xf32>
    %c0_10 = arith.constant 0 : index
    %c0_11 = arith.constant 0 : index
    %c0_12 = arith.constant 0 : index
    %13 = vector.load %arg6[%c0_10, %c0_11, %c0_12] : memref<9x1x256xf32, #tpu.memory_space<vmem>>, vector<1x1x256xf32>
    %14 = vector.shape_cast %13 : vector<1x1x256xf32> to vector<1x256xf32>
    %15 = vector.broadcast %14 : vector<1x256xf32> to vector<32x256xf32>
    %16 = arith.mulf %12, %15 : vector<32x256xf32>
    %c0_13 = arith.constant 0 : index
    %c0_14 = arith.constant 0 : index
    %17 = vector.load %arg8[%c0_13, %c0_14] : memref<288x256xf32, #tpu.memory_space<vmem>>, vector<32x256xf32>
    tpu.vector_store %arg8[%c0_13, %c0_14], %16 {strides = array<i32>} : memref<288x256xf32, #tpu.memory_space<vmem>>, vector<32x256xf32>,
    %c16_i32 = arith.constant 16 : i32
    %18 = tpu.dynamic_rotate %11 by %c16_i32 dim 1 : vector<32x256xf32>, i32 -> vector<32x256xf32>
    %c1 = arith.constant 1 : index
    %c0_15 = arith.constant 0 : index
    %c0_16 = arith.constant 0 : index
    %19 = vector.load %arg6[%c1, %c0_15, %c0_16] : memref<9x1x256xf32, #tpu.memory_space<vmem>>, vector<1x1x256xf32>
    %20 = vector.shape_cast %19 : vector<1x1x256xf32> to vector<1x256xf32>
    %21 = vector.broadcast %20 : vector<1x256xf32> to vector<32x256xf32>
    %22 = arith.mulf %18, %21 : vector<32x256xf32>
    %c32 = arith.constant 32 : index
    %c0_17 = arith.constant 0 : index
    %23 = vector.load %arg8[%c32, %c0_17] : memref<288x256xf32, #tpu.memory_space<vmem>>, vector<32x256xf32>
    tpu.vector_store %arg8[%c32, %c0_17], %22 {strides = array<i32>} : memref<288x256xf32, #tpu.memory_space<vmem>>, vector<32x256xf32>,
    %c15_i32 = arith.constant 15 : i32
    %24 = tpu.dynamic_rotate %11 by %c15_i32 dim 1 : vector<32x256xf32>, i32 -> vector<32x256xf32>
    %c2 = arith.constant 2 : index
    %c0_18 = arith.constant 0 : index
    %c0_19 = arith.constant 0 : index
    %25 = vector.load %arg6[%c2, %c0_18, %c0_19] : memref<9x1x256xf32, #tpu.memory_space<vmem>>, vector<1x1x256xf32>
    %26 = vector.shape_cast %25 : vector<1x1x256xf32> to vector<1x256xf32>
    %27 = vector.broadcast %26 : vector<1x256xf32> to vector<32x256xf32>
    %28 = arith.mulf %24, %27 : vector<32x256xf32>
    %c64 = arith.constant 64 : index
    %c0_20 = arith.constant 0 : index
    %29 = vector.load %arg8[%c64, %c0_20] : memref<288x256xf32, #tpu.memory_space<vmem>>, vector<32x256xf32>
    tpu.vector_store %arg8[%c64, %c0_20], %28 {strides = array<i32>} : memref<288x256xf32, #tpu.memory_space<vmem>>, vector<32x256xf32>,
    %c1_i32 = arith.constant 1 : i32
    %30 = tpu.dynamic_rotate %11 by %c1_i32 dim 1 : vector<32x256xf32>, i32 -> vector<32x256xf32>
    %c3 = arith.constant 3 : index
    %c0_21 = arith.constant 0 : index
    %c0_22 = arith.constant 0 : index
    %31 = vector.load %arg6[%c3, %c0_21, %c0_22] : memref<9x1x256xf32, #tpu.memory_space<vmem>>, vector<1x1x256xf32>
    %32 = vector.shape_cast %31 : vector<1x1x256xf32> to vector<1x256xf32>
    %33 = vector.broadcast %32 : vector<1x256xf32> to vector<32x256xf32>
    %34 = arith.mulf %30, %33 : vector<32x256xf32>
    %c96 = arith.constant 96 : index
    %c0_23 = arith.constant 0 : index
    %35 = vector.load %arg8[%c96, %c0_23] : memref<288x256xf32, #tpu.memory_space<vmem>>, vector<32x256xf32>
    tpu.vector_store %arg8[%c96, %c0_23], %34 {strides = array<i32>} : memref<288x256xf32, #tpu.memory_space<vmem>>, vector<32x256xf32>,
    %c128 = arith.constant 128 : index
    %c0_24 = arith.constant 0 : index
    %36 = vector.load %arg8[%c128, %c0_24] : memref<288x256xf32, #tpu.memory_space<vmem>>, vector<32x256xf32>
    tpu.vector_store %arg8[%c128, %c0_24], %11 {strides = array<i32>} : memref<288x256xf32, #tpu.memory_space<vmem>>, vector<32x256xf32>,
    %c255_i32 = arith.constant 255 : i32
    %37 = tpu.dynamic_rotate %11 by %c255_i32 dim 1 : vector<32x256xf32>, i32 -> vector<32x256xf32>
    %c5 = arith.constant 5 : index
    %c0_25 = arith.constant 0 : index
    %c0_26 = arith.constant 0 : index
    %38 = vector.load %arg6[%c5, %c0_25, %c0_26] : memref<9x1x256xf32, #tpu.memory_space<vmem>>, vector<1x1x256xf32>
    %39 = vector.shape_cast %38 : vector<1x1x256xf32> to vector<1x256xf32>
    %40 = vector.broadcast %39 : vector<1x256xf32> to vector<32x256xf32>
    %41 = arith.mulf %37, %40 : vector<32x256xf32>
    %c160 = arith.constant 160 : index
    %c0_27 = arith.constant 0 : index
    %42 = vector.load %arg8[%c160, %c0_27] : memref<288x256xf32, #tpu.memory_space<vmem>>, vector<32x256xf32>
    tpu.vector_store %arg8[%c160, %c0_27], %41 {strides = array<i32>} : memref<288x256xf32, #tpu.memory_space<vmem>>, vector<32x256xf32>,
    %c241_i32 = arith.constant 241 : i32
    %43 = tpu.dynamic_rotate %11 by %c241_i32 dim 1 : vector<32x256xf32>, i32 -> vector<32x256xf32>
    %c6 = arith.constant 6 : index
    %c0_28 = arith.constant 0 : index
    %c0_29 = arith.constant 0 : index
    %44 = vector.load %arg6[%c6, %c0_28, %c0_29] : memref<9x1x256xf32, #tpu.memory_space<vmem>>, vector<1x1x256xf32>
    %45 = vector.shape_cast %44 : vector<1x1x256xf32> to vector<1x256xf32>
    %46 = vector.broadcast %45 : vector<1x256xf32> to vector<32x256xf32>
    %47 = arith.mulf %43, %46 : vector<32x256xf32>
    %c192 = arith.constant 192 : index
    %c0_30 = arith.constant 0 : index
    %48 = vector.load %arg8[%c192, %c0_30] : memref<288x256xf32, #tpu.memory_space<vmem>>, vector<32x256xf32>
    tpu.vector_store %arg8[%c192, %c0_30], %47 {strides = array<i32>} : memref<288x256xf32, #tpu.memory_space<vmem>>, vector<32x256xf32>,
    %c240_i32 = arith.constant 240 : i32
    %49 = tpu.dynamic_rotate %11 by %c240_i32 dim 1 : vector<32x256xf32>, i32 -> vector<32x256xf32>
    %c7 = arith.constant 7 : index
    %c0_31 = arith.constant 0 : index
    %c0_32 = arith.constant 0 : index
    %50 = vector.load %arg6[%c7, %c0_31, %c0_32] : memref<9x1x256xf32, #tpu.memory_space<vmem>>, vector<1x1x256xf32>
    %51 = vector.shape_cast %50 : vector<1x1x256xf32> to vector<1x256xf32>
    %52 = vector.broadcast %51 : vector<1x256xf32> to vector<32x256xf32>
    %53 = arith.mulf %49, %52 : vector<32x256xf32>
    %c224 = arith.constant 224 : index
    %c0_33 = arith.constant 0 : index
    %54 = vector.load %arg8[%c224, %c0_33] : memref<288x256xf32, #tpu.memory_space<vmem>>, vector<32x256xf32>
    tpu.vector_store %arg8[%c224, %c0_33], %53 {strides = array<i32>} : memref<288x256xf32, #tpu.memory_space<vmem>>, vector<32x256xf32>,
    %c239_i32 = arith.constant 239 : i32
    %55 = tpu.dynamic_rotate %11 by %c239_i32 dim 1 : vector<32x256xf32>, i32 -> vector<32x256xf32>
    %c8 = arith.constant 8 : index
    %c0_34 = arith.constant 0 : index
    %c0_35 = arith.constant 0 : index
    %56 = vector.load %arg6[%c8, %c0_34, %c0_35] : memref<9x1x256xf32, #tpu.memory_space<vmem>>, vector<1x1x256xf32>
    %57 = vector.shape_cast %56 : vector<1x1x256xf32> to vector<1x256xf32>
    %58 = vector.broadcast %57 : vector<1x256xf32> to vector<32x256xf32>
    %59 = arith.mulf %55, %58 : vector<32x256xf32>
    %c256 = arith.constant 256 : index
    %c0_36 = arith.constant 0 : index
    %60 = vector.load %arg8[%c256, %c0_36] : memref<288x256xf32, #tpu.memory_space<vmem>>, vector<32x256xf32>
    tpu.vector_store %arg8[%c256, %c0_36], %59 {strides = array<i32>} : memref<288x256xf32, #tpu.memory_space<vmem>>, vector<32x256xf32>,
    %c0_37 = arith.constant 0 : index
    %c0_38 = arith.constant 0 : index
    %61 = vector.load %arg4[%c0_37, %c0_38] : memref<8x288xf32, #tpu.memory_space<vmem>>, vector<8x288xf32>
    %c0_39 = arith.constant 0 : index
    %c0_40 = arith.constant 0 : index
    %62 = vector.load %arg8[%c0_39, %c0_40] : memref<288x256xf32, #tpu.memory_space<vmem>>, vector<288x256xf32>
    %cst_41 = arith.constant dense<0.000000e+00> : vector<8x256xf32>
    %63 = tpu.matmul %61, %62, %cst_41 {dimension_numbers = #tpu.dot_dimension_numbers<[1], [0], [0], [1], [0, 0, 1, 1], [], []>} : vector<8x288xf32>, vector<288x256xf32>, vector<8x256xf32> -> vector<8x256xf32>
    %c0_42 = arith.constant 0 : index
    %c0_43 = arith.constant 0 : index
    %64 = vector.load %arg5[%c0_42, %c0_43] : memref<8x1xf32, #tpu.memory_space<vmem>>, vector<8x1xf32>
    %65 = vector.broadcast %64 : vector<8x1xf32> to vector<8x256xf32>
    %66 = arith.addf %63, %65 : vector<8x256xf32>
    %cst_44 = arith.constant 0.000000e+00 : f32
    %67 = vector.broadcast %cst_44 : f32 to vector<8x256xf32>
    %68 = arith.maximumf %66, %67 : vector<8x256xf32>
    %c0_45 = arith.constant 0 : index
    %c4 = arith.constant 4 : index
    %c0_46 = arith.constant 0 : index
    %69 = vector.load %arg7[%c0_45, %c4, %c0_46] : memref<1x12x256xf32, #tpu.memory_space<vmem>>, vector<1x8x256xf32>
    %70 = vector.shape_cast %69 : vector<1x8x256xf32> to vector<8x256xf32>
    %71 = vector.shape_cast %68 : vector<8x256xf32> to vector<1x8x256xf32>
    tpu.vector_store %arg7[%c0_45, %c4, %c0_46], %71 {strides = array<i32>} : memref<1x12x256xf32, #tpu.memory_space<vmem>>, vector<1x8x256xf32>,
    return
  }
  func.func @transform_0(%arg0: i32) -> (i32, i32, i32) {
    %c0_i32 = arith.constant 0 : i32
    %c0_i32_0 = arith.constant 0 : i32
    %c0_i32_1 = arith.constant 0 : i32
    return %arg0, %c0_i32, %c0_i32_0 : i32, i32, i32
  }
  func.func @transform_1(%arg0: i32) -> (i32, i32) {
    %c0_i32 = arith.constant 0 : i32
    %c0_i32_0 = arith.constant 0 : i32
    %c0_i32_1 = arith.constant 0 : i32
    return %c0_i32, %c0_i32_0 : i32, i32
  }
  func.func @transform_2(%arg0: i32) -> (i32, i32) {
    %c0_i32 = arith.constant 0 : i32
    %c0_i32_0 = arith.constant 0 : i32
    %c0_i32_1 = arith.constant 0 : i32
    return %c0_i32, %c0_i32_0 : i32, i32
  }
  func.func @transform_3(%arg0: i32) -> (i32, i32) {
    %c0_i32 = arith.constant 0 : i32
    %c0_i32_0 = arith.constant 0 : i32
    %c0_i32_1 = arith.constant 0 : i32
    return %c0_i32, %c0_i32_0 : i32, i32
  }
  func.func @transform_4(%arg0: i32) -> (i32, i32) {
    %c0_i32 = arith.constant 0 : i32
    %c0_i32_0 = arith.constant 0 : i32
    %c0_i32_1 = arith.constant 0 : i32
    return %c0_i32, %c0_i32_0 : i32, i32
  }
  func.func @transform_5(%arg0: i32) -> (i32, i32, i32) {
    %c0_i32 = arith.constant 0 : i32
    %c0_i32_0 = arith.constant 0 : i32
    %c0_i32_1 = arith.constant 0 : i32
    %c0_i32_2 = arith.constant 0 : i32
    return %c0_i32, %c0_i32_0, %c0_i32_1 : i32, i32, i32
  }
  func.func @transform_6(%arg0: i32) -> (i32, i32, i32) {
    %c0_i32 = arith.constant 0 : i32
    %c0_i32_0 = arith.constant 0 : i32
    %c0_i32_1 = arith.constant 0 : i32
    return %arg0, %c0_i32, %c0_i32_0 : i32, i32, i32
  }
}

</mosaic_0001>

<llo_original>
// kernel: bottleneck_forward.1
$region0: #{bottleneck_forward.1}
  #allocation0 [shape = 'u32[]', space=smem, size = 0x4, offset = 0x4, fixed_abs, tag = 'smem constant byte address 0x4 - core index']
  #allocation1 [shape = 'u32[144,128]{1,0:T(1,128)}', space=vmem, size = 0x12000, scoped, tag = 'internal scratch']
  #allocation2 [shape = 'f32[288,256]{1,0:T(8,128)}', space=vmem, size = 0x48000, scoped, tag = 'scratch operand']
  %s0 = inlined_call_operand.vmem [shape: f32[2,4,256], index: 0, kind: input, shape index: {}]
  %s1 = inlined_call_operand.vmem [shape: f32[32,4], index: 1, kind: input, shape index: {}]
  %s2 = inlined_call_operand.vmem [shape: f32[32,1], index: 2, kind: input, shape index: {}]
  %s3 = inlined_call_operand.vmem [shape: f32[8,288], index: 3, kind: input, shape index: {}]
  %s4 = inlined_call_operand.vmem [shape: f32[8,1], index: 4, kind: input, shape index: {}]
  %s5 = inlined_call_operand.vmem [shape: f32[9,1,256], index: 5, kind: input, shape index: {}]
  %s6 = inlined_call_operand.vmem [shape: f32[2,12,256], index: 6, kind: output, shape index: {}]
  %s7 = sld [smem:[#allocation0]]
  $region57: #{bottleneck_forward.1} parent=0
    _
  %s9 = ssub.s32 1, %s7
  %s10 = scalar_select 0, %s9, %s7
  loop: start=0, step=1, limit=4
  $region2: #{bottleneck_forward.1} parent=0 // loop_pre_header
    _
  $region3: #{bottleneck_forward.1} parent=0 // loop_header
    %s12 = sphi 0, %s16
    %p13 = scmp.ge.s32.totalorder %s12, 4
    %s22 = sphi 0, %s24
    %s25 = sphi 0, %s22
    %s26 = sphi 0, %s25
    %s42 = sphi 0, %s26
    %s46 = sphi 0, %s46
    %s48 = sphi 0, %s46
    %s49 = sphi 0, %s48
    %s63 = sphi 0, %s49
    %s67 = sphi 0, %s67
    %s69 = sphi 0, %s67
    %s70 = sphi 0, %s69
    %s84 = sphi 0, %s70
    %s88 = sphi 0, %s88
    %s90 = sphi 0, %s88
    %s91 = sphi 0, %s90
    %s105 = sphi 0, %s91
    %s109 = sphi 0, %s109
    %s111 = sphi 0, %s109
    %s112 = sphi 0, %s111
    %s126 = sphi 0, %s112
    %s130 = sphi 0, %s130
    %s132 = sphi 0, %s130
    %s133 = sphi 0, %s132
    %s147 = sphi 0, %s133
    %s153 = sphi 0, %s155
    %s156 = sphi 0, %s153
    %s157 = sphi 0, %s156
    %s173 = sphi 0, %s157
  $region4: #{bottleneck_forward.1} parent=0 // loop_header_branch
    %15 = sbr.rel (%p13) target = $region8
  $region5: #{bottleneck_forward.1} parent=0 // loop_body
    %s17 = ssub.s32 %s12, 1
    %s18 = ssub.s32 %s12, 2
    %s19 = sadd.s32 %s12, 1
    %s20 = ssub.s32 %s12, %s19
    %p21 = scmp.eq.s32.totalorder %s20, 0
    %s23 = sadd.s32 %s22, 1
    %s24 = scalar_select %p21, %s22, %s23
    %p27 = pneg %p21
    %p28 = scmp.eq.s32.totalorder %s12, 1
    %p29 = por %p27, %p28
    %p30 = scmp.ne.s32.totalorder %s22, %s25
    %p31 = scmp.eq.s32.totalorder %s12, 0
    %p32 = por %p30, %p31
    %p33 = scmp.ne.s32.totalorder %s22, %s25
    %p34 = scmp.eq.s32.totalorder %s17, 1
    %p35 = por %p33, %p34
    %p36 = scmp.ne.s32.totalorder %s25, %s26
    %p37 = scmp.eq.s32.totalorder %s17, 0
    %p38 = por %p36, %p37
    %p39 = scmp.ne.s32.totalorder %s25, %s26
    %p40 = scmp.eq.s32.totalorder %s18, 1
    %p41 = por %p39, %p40
    %p43 = scmp.ne.s32.totalorder %s26, %s42
    %p44 = scmp.eq.s32.totalorder %s18, 0
    %p45 = por %p43, %p44
    %s47 = sadd.s32 %s46, 1
    %p50 = scmp.eq.s32.totalorder %s12, 1
    %p51 = scmp.ne.s32.totalorder %s46, %s48
    %p52 = scmp.eq.s32.totalorder %s12, 0
    %p53 = por %p51, %p52
    %p54 = scmp.ne.s32.totalorder %s46, %s48
    %p55 = scmp.eq.s32.totalorder %s17, 1
    %p56 = por %p54, %p55
    %p57 = scmp.ne.s32.totalorder %s48, %s49
    %p58 = scmp.eq.s32.totalorder %s17, 0
    %p59 = por %p57, %p58
    %p60 = scmp.ne.s32.totalorder %s48, %s49
    %p61 = scmp.eq.s32.totalorder %s18, 1
    %p62 = por %p60, %p61
    %p64 = scmp.ne.s32.totalorder %s49, %s63
    %p65 = scmp.eq.s32.totalorder %s18, 0
    %p66 = por %p64, %p65
    %s68 = sadd.s32 %s67, 1
    %p71 = scmp.eq.s32.totalorder %s12, 1
    %p72 = scmp.ne.s32.totalorder %s67, %s69
    %p73 = scmp.eq.s32.totalorder %s12, 0
    %p74 = por %p72, %p73
    %p75 = scmp.ne.s32.totalorder %s67, %s69
    %p76 = scmp.eq.s32.totalorder %s17, 1
    %p77 = por %p75, %p76
    %p78 = scmp.ne.s32.totalorder %s69, %s70
    %p79 = scmp.eq.s32.totalorder %s17, 0
    %p80 = por %p78, %p79
    %p81 = scmp.ne.s32.totalorder %s69, %s70
    %p82 = scmp.eq.s32.totalorder %s18, 1
    %p83 = por %p81, %p82
    %p85 = scmp.ne.s32.totalorder %s70, %s84
    %p86 = scmp.eq.s32.totalorder %s18, 0
    %p87 = por %p85, %p86
    %s89 = sadd.s32 %s88, 1
    %p92 = scmp.eq.s32.totalorder %s12, 1
    %p93 = scmp.ne.s32.totalorder %s88, %s90
    %p94 = scmp.eq.s32.totalorder %s12, 0
    %p95 = por %p93, %p94
    %p96 = scmp.ne.s32.totalorder %s88, %s90
    %p97 = scmp.eq.s32.totalorder %s17, 1
    %p98 = por %p96, %p97
    %p99 = scmp.ne.s32.totalorder %s90, %s91
    %p100 = scmp.eq.s32.totalorder %s17, 0
    %p101 = por %p99, %p100
    %p102 = scmp.ne.s32.totalorder %s90, %s91
    %p103 = scmp.eq.s32.totalorder %s18, 1
    %p104 = por %p102, %p103
    %p106 = scmp.ne.s32.totalorder %s91, %s105
    %p107 = scmp.eq.s32.totalorder %s18, 0
    %p108 = por %p106, %p107
    %s110 = sadd.s32 %s109, 1
    %p113 = scmp.eq.s32.totalorder %s12, 1
    %p114 = scmp.ne.s32.totalorder %s109, %s111
    %p115 = scmp.eq.s32.totalorder %s12, 0
    %p116 = por %p114, %p115
    %p117 = scmp.ne.s32.totalorder %s109, %s111
    %p118 = scmp.eq.s32.totalorder %s17, 1
    %p119 = por %p117, %p118
    %p120 = scmp.ne.s32.totalorder %s111, %s112
    %p121 = scmp.eq.s32.totalorder %s17, 0
    %p122 = por %p120, %p121
    %p123 = scmp.ne.s32.totalorder %s111, %s112
    %p124 = scmp.eq.s32.totalorder %s18, 1
    %p125 = por %p123, %p124
    %p127 = scmp.ne.s32.totalorder %s112, %s126
    %p128 = scmp.eq.s32.totalorder %s18, 0
    %p129 = por %p127, %p128
    %s131 = sadd.s32 %s130, 1
    %p134 = scmp.eq.s32.totalorder %s12, 1
    %p135 = scmp.ne.s32.totalorder %s130, %s132
    %p136 = scmp.eq.s32.totalorder %s12, 0
    %p137 = por %p135, %p136
    %p138 = scmp.ne.s32.totalorder %s130, %s132
    %p139 = scmp.eq.s32.totalorder %s17, 1
    %p140 = por %p138, %p139
    %p141 = scmp.ne.s32.totalorder %s132, %s133
    %p142 = scmp.eq.s32.totalorder %s17, 0
    %p143 = por %p141, %p142
    %p144 = scmp.ne.s32.totalorder %s132, %s133
    %p145 = scmp.eq.s32.totalorder %s18, 1
    %p146 = por %p144, %p145
    %p148 = scmp.ne.s32.totalorder %s133, %s147
    %p149 = scmp.eq.s32.totalorder %s18, 0
    %p150 = por %p148, %p149
    %s151 = ssub.s32 %s12, %s19
    %p152 = scmp.eq.s32.totalorder %s151, 0
    %s154 = sadd.s32 %s153, 1
    %s155 = scalar_select %p152, %s153, %s154
    %p158 = pneg %p152
    %p159 = scmp.eq.s32.totalorder %s12, 1
    %p160 = por %p158, %p159
    %p161 = scmp.ne.s32.totalorder %s153, %s156
    %p162 = scmp.eq.s32.totalorder %s12, 0
    %p163 = por %p161, %p162
    %p164 = scmp.ne.s32.totalorder %s153, %s156
    %p165 = scmp.eq.s32.totalorder %s17, 1
    %p166 = por %p164, %p165
    %p167 = scmp.ne.s32.totalorder %s156, %s157
    %p168 = scmp.eq.s32.totalorder %s17, 0
    %p169 = por %p167, %p168
    %p170 = scmp.ne.s32.totalorder %s156, %s157
    %p171 = scmp.eq.s32.totalorder %s18, 1
    %p172 = por %p170, %p171
    %p174 = scmp.ne.s32.totalorder %s157, %s173
    %p175 = scmp.eq.s32.totalorder %s18, 0
    %p176 = por %p174, %p175
    %p177 = scmp.le.s32.totalorder 1, %s12
    %p178 = scmp.lt.s32.totalorder %s12, 3
    %p179 = pnand %p177, %p178
    %p180 = pneg %p179
    // Predicated region
    $region9: #{bottleneck_forward.1} parent=5 // pred_check
      _
    $region10: #{bottleneck_forward.1} parent=5 // pred_check_branch
      %182 = sbr.rel (%p179) target = $region12
    $region11: #{bottleneck_forward.1} parent=5 // pred_region
      %s183 = ssub.s32 %s12, 1
      // Predicated region
      $region13: #{bottleneck_forward.1} parent=11 // pred_check
        %p184 = pneg %p59
      $region14: #{bottleneck_forward.1} parent=11 // pred_check_branch
        %186 = sbr.rel (%p184) target = $region16
      $region15: #{bottleneck_forward.1} parent=11 // pred_region
        _
      $region16: #{bottleneck_forward.1} parent=11 // pred_fallthru
        _
      // Predicated region
      $region17: #{bottleneck_forward.1} parent=11 // pred_check
        %p187 = pneg %p80
      $region18: #{bottleneck_forward.1} parent=11 // pred_check_branch
        %189 = sbr.rel (%p187) target = $region20
      $region19: #{bottleneck_forward.1} parent=11 // pred_region
        _
      $region20: #{bottleneck_forward.1} parent=11 // pred_fallthru
        _
      // Predicated region
      $region21: #{bottleneck_forward.1} parent=11 // pred_check
        %p190 = pneg %p101
      $region22: #{bottleneck_forward.1} parent=11 // pred_check_branch
        %192 = sbr.rel (%p190) target = $region24
      $region23: #{bottleneck_forward.1} parent=11 // pred_region
        _
      $region24: #{bottleneck_forward.1} parent=11 // pred_fallthru
        _
      // Predicated region
      $region25: #{bottleneck_forward.1} parent=11 // pred_check
        %p193 = pneg %p122
      $region26: #{bottleneck_forward.1} parent=11 // pred_check_branch
        %195 = sbr.rel (%p193) target = $region28
      $region27: #{bottleneck_forward.1} parent=11 // pred_region
        _
      $region28: #{bottleneck_forward.1} parent=11 // pred_fallthru
        _
      // Predicated region
      $region29: #{bottleneck_forward.1} parent=11 // pred_check
        %p196 = pneg %p143
      $region30: #{bottleneck_forward.1} parent=11 // pred_check_branch
        %198 = sbr.rel (%p196) target = $region32
      $region31: #{bottleneck_forward.1} parent=11 // pred_region
        _
      $region32: #{bottleneck_forward.1} parent=11 // pred_fallthru
        _
    $region12: #{bottleneck_forward.1} parent=5 // pred_fallthru
      _
    %p199 = scmp.lt.s32.totalorder %s12, 2
    // Predicated region
    $region33: #{bottleneck_forward.1} parent=5 // pred_check
      %p200 = pneg %p199
    $region34: #{bottleneck_forward.1} parent=5 // pred_check_branch
      %202 = sbr.rel (%p200) target = $region36
    $region35: #{bottleneck_forward.1} parent=5 // pred_region
      // Predicated region
      $region37: #{bottleneck_forward.1} parent=35 // pred_check
        %p203 = pneg %p32
      $region38: #{bottleneck_forward.1} parent=35 // pred_check_branch
        %205 = sbr.rel (%p203) target = $region40
      $region39: #{bottleneck_forward.1} parent=35 // pred_region
        %p206 = scmp.lt.s32.totalorder %s12, 1
        %s207 = scalar_select %p206, %s12, 1
        %s208 = smul.addr %s207, 2
        %s209 = smul.addr %s208, 4
        %s210 = scalar_lea.vmem %s0, %s209
      $region40: #{bottleneck_forward.1} parent=35 // pred_fallthru
        _
    $region36: #{bottleneck_forward.1} parent=5 // pred_fallthru
      _
    %p211 = scmp.le.s32.totalorder 1, %s12
    %p212 = scmp.lt.s32.totalorder %s12, 3
    %p213 = pnand %p211, %p212
    %p214 = pneg %p213
    // Predicated region
    $region41: #{bottleneck_forward.1} parent=5 // pred_check
      _
    $region42: #{bottleneck_forward.1} parent=5 // pred_check_branch
      %216 = sbr.rel (%p213) target = $region44
    $region43: #{bottleneck_forward.1} parent=5 // pred_region
      %s217 = ssub.s32 %s12, 1
      %p218 = scmp.lt.s32.totalorder %s17, 1
      %s219 = scalar_select %p218, %s17, 1
      %s220 = smul.addr %s219, 2
      %s221 = smul.addr %s220, 4
      %s222 = scalar_lea.vmem %s0, %s221
      %p223 = pneg %p38
      %p224 = pneg %p35
      %p225 = pneg %p59
      %p226 = pneg %p56
      %p227 = pneg %p80
      %p228 = pneg %p77
      %p229 = pneg %p101
      %p230 = pneg %p98
      %p231 = pneg %p122
      %p232 = pneg %p119
      %p233 = pneg %p143
      %p234 = pneg %p140
      %p235 = pneg %p169
      %p236 = pneg %p166
      %p237 = scmp.lt.s32.totalorder %s17, 1
      %s238 = scalar_select %p237, %s17, 1
      %s239 = smul.addr %s238, 4
      %s240 = smul.addr %s239, 8
      %s241 = scalar_lea.vmem %s6, %s240
      %p242 = scmp.lt.s32.totalorder %s17, 1
      %s243 = scalar_select %p242, %s17, 1
      %s244 = smul.addr %s243, 2
      %s245 = smul.addr %s244, 4
      %s246 = scalar_lea.vmem %s0, %s245
      %p247 = scmp.lt.s32.totalorder %s17, 1
      %s248 = scalar_select %p247, %s17, 1
      %s249 = smul.addr %s248, 4
      %s250 = smul.addr %s249, 8
      %s251 = scalar_lea.vmem %s6, %s250
      %v252 = vld [vmem:[%s246] sm:$0xff]
      %v254 = vcombine.high %v252, %v252
      %256 = vst [vmem:[%s251] sm:$0xf] %v252
      %257 = vst [vmem:[%s251 + $0x8] sm:$0xf] %v254
      %v258 = vld [vmem:[%s1] sm:$0xff]
      %v259 = vld [vmem:[%s1 + $0x8] sm:$0xff]
      %v260 = vld [vmem:[%s1 + $0x10] sm:$0xff]
      %v261 = vld [vmem:[%s1 + $0x18] sm:$0xff]
      %v262 = vld [vmem:[%s2] sm:$0xff]
      %v263 = vld [vmem:[%s2 + $0x8] sm:$0xff]
      %v264 = vld [vmem:[%s2 + $0x10] sm:$0xff]
      %v265 = vld [vmem:[%s2 + $0x18] sm:$0xff]
      %267 = vset.pattern.permute.xlu0 0
      %268 = vperm.xlu0 %267, %v262
      %v269 = vpop.permute.xlu0 %268
      %272 = vset.pattern.permute.xlu0 0
      %273 = vperm.xlu0 %272, %v263
      %v274 = vpop.permute.xlu0 %273
      %277 = vset.pattern.permute.xlu0 0
      %278 = vperm.xlu0 %277, %v264
      %v279 = vpop.permute.xlu0 %278
      %282 = vset.pattern.permute.xlu0 0
      %283 = vperm.xlu0 %282, %v265
      %v284 = vpop.permute.xlu0 %283
      %vm286 = vcmask 31744
      %v288 = vsel %vm286, %v258, 0
      %v291 = vsel %vm286, %v259, 0
      %v294 = vsel %vm286, %v260, 0
      %v297 = vsel %vm286, %v261, 0
      %vm299 = vcmask 1043456
      %v300 = vsel %vm299, %v252, 0
      %v302 = vsel %vm299, %v254, 0
      %304 = vmatprep.subr.mxu0 %v302
      %305 = vmatpush1.msra.mxu0 %v300
      %306 = vmatprep.subr.mxu0 0.0
      %307 = vmatpush1.msra.mxu0 0.0
      %308 = vmatprep.subr.mxu0 0.0
      %309 = vmatpush1.msra.mxu0 0.0
      %310 = vmatprep.subr.mxu0 0.0
      %311 = vmatpush1.msra.mxu0 0.0
      %312 = vmatprep.subr.mxu0 0.0
      %313 = vmatpush1.msra.mxu0 0.0
      %314 = vmatprep.subr.mxu0 0.0
      %315 = vmatpush1.msra.mxu0 0.0
      %316 = vmatprep.subr.mxu0 0.0
      %317 = vmatpush1.msra.mxu0 0.0
      %318 = vmatprep.subr.mxu0 0.0
      %319 = vmatpush1.msra.mxu0 0.0
      %320 = vmatprep.subr.mxu0 0.0
      %321 = vmatpush1.msra.mxu0 0.0
      %322 = vmatprep.subr.mxu0 0.0
      %323 = vmatpush1.msra.mxu0 0.0
      %324 = vmatprep.subr.mxu0 0.0
      %325 = vmatpush1.msra.mxu0 0.0
      %326 = vmatprep.subr.mxu0 0.0
      %327 = vmatpush1.msra.mxu0 0.0
      %328 = vmatprep.subr.mxu0 0.0
      %329 = vmatpush1.msra.mxu0 0.0
      %330 = vmatprep.subr.mxu0 0.0
      %331 = vmatpush1.msra.mxu0 0.0
      %332 = vmatprep.subr.mxu0 0.0
      %333 = vmatpush1.msra.mxu0 0.0
      %334 = vmatprep.subr.mxu0 0.0
      %335 = vmatpush1.msra.mxu0 0.0
      %336 = vmatprep.subr.mxu0 0.0
      %337 = vmatpush1.msra.mxu0 0.0
      %338 = vmatprep.subr.mxu0 0.0
      %339 = vmatpush1.msra.mxu0 0.0
      %340 = vmatprep.subr.mxu0 0.0
      %341 = vmatpush1.msra.mxu0 0.0
      %342 = vmatprep.subr.mxu0 0.0
      %343 = vmatpush1.msra.mxu0 0.0
      %344 = vmatprep.subr.mxu0 0.0
      %345 = vmatpush1.msra.mxu0 0.0
      %346 = vmatprep.subr.mxu0 0.0
      %347 = vmatpush1.msra.mxu0 0.0
      %348 = vmatprep.subr.mxu0 0.0
      %349 = vmatpush1.msra.mxu0 0.0
      %350 = vmatprep.subr.mxu0 0.0
      %351 = vmatpush1.msra.mxu0 0.0
      %352 = vmatprep.subr.mxu0 0.0
      %353 = vmatpush1.msra.mxu0 0.0
      %354 = vmatprep.subr.mxu0 0.0
      %355 = vmatpush1.msra.mxu0 0.0
      %356 = vmatprep.subr.mxu0 0.0
      %357 = vmatpush1.msra.mxu0 0.0
      %358 = vmatprep.subr.mxu0 0.0
      %359 = vmatpush1.msra.mxu0 0.0
      %360 = vmatprep.subr.mxu0 0.0
      %361 = vmatpush1.msra.mxu0 0.0
      %362 = vmatprep.subr.mxu0 0.0
      %363 = vmatpush1.msra.mxu0 0.0
      %364 = vmatprep.subr.mxu0 0.0
      %365 = vmatpush1.msra.mxu0 0.0
      %366 = vmatprep.subr.mxu0 0.0
      %367 = vmatpush1.msra.mxu0 0.0
      %368 = vmatprep.mubr.f32.mxu0 0.0
      %369 = vmatmul.mubr.f32.gmra.mrb[0].mxu0 %v288
      %v370 = vpop.f32.mrb[0].mxu0
      %v371 = vadd.f32 %v269, %v370
      %v372 = vpop.f32.mrb[0].mxu0
      %v373 = vadd.f32 %v269, %v372
      %374 = vmatprep.mubr.f32.mxu0 0.0
      %375 = vmatmul.mubr.f32.gmra.mrb[0].mxu0 %v291
      %v376 = vpop.f32.mrb[0].mxu0
      %v377 = vadd.f32 %v274, %v376
      %v378 = vpop.f32.mrb[0].mxu0
      %v379 = vadd.f32 %v274, %v378
      %380 = vmatprep.mubr.f32.mxu0 0.0
      %381 = vmatmul.mubr.f32.gmra.mrb[0].mxu0 %v294
      %v382 = vpop.f32.mrb[0].mxu0
      %v383 = vadd.f32 %v279, %v382
      %v384 = vpop.f32.mrb[0].mxu0
      %v385 = vadd.f32 %v279, %v384
      %386 = vmatprep.mubr.f32.mxu0 0.0
      %387 = vmatmul.mubr.f32.gmra.mrb[0].mxu0 %v297
      %v388 = vpop.f32.mrb[0].mxu0
      %v389 = vadd.f32 %v284, %v388
      %v390 = vpop.f32.mrb[0].mxu0
      %v391 = vadd.f32 %v284, %v390
      %392 = vdwg.mxu0
      %v393 = vmax.f32 %v371, 0.0
      %v394 = vmax.f32 %v373, 0.0
      %v395 = vmax.f32 %v377, 0.0
      %v396 = vmax.f32 %v379, 0.0
      %v397 = vmax.f32 %v383, 0.0
      %v398 = vmax.f32 %v385, 0.0
      %v399 = vmax.f32 %v389, 0.0
      %v400 = vmax.f32 %v391, 0.0
      %401 = vrot.lane.b32.xlu0 %v393, 17
      %v402 = vpop.permute.xlu0 %401
      %403 = vrot.lane.b32.xlu0 %v395, 17
      %v404 = vpop.permute.xlu0 %403
      %405 = vrot.lane.b32.xlu0 %v397, 17
      %v406 = vpop.permute.xlu0 %405
      %407 = vrot.lane.b32.xlu0 %v399, 17
      %v408 = vpop.permute.xlu0 %407
      %409 = vrot.lane.b32.xlu0 %v394, 17
      %v410 = vpop.permute.xlu0 %409
      %411 = vrot.lane.b32.xlu0 %v396, 17
      %v412 = vpop.permute.xlu0 %411
      %413 = vrot.lane.b32.xlu0 %v398, 17
      %v414 = vpop.permute.xlu0 %413
      %415 = vrot.lane.b32.xlu0 %v400, 17
      %v416 = vpop.permute.xlu0 %415
      %v417 = vlaneseq
      %v418 = vand.u32 %v417, 127
      %vm419 = vcmp.lt.s32.totalorder %v418, 17
      %v420 = vsel %vm419, %v402, %v410
      %v421 = vsel %vm419, %v404, %v412
      %v422 = vsel %vm419, %v406, %v414
      %v423 = vsel %vm419, %v408, %v416
      %v424 = vsel %vm419, %v410, %v402
      %v425 = vsel %vm419, %v412, %v404
      %v426 = vsel %vm419, %v414, %v406
      %v427 = vsel %vm419, %v416, %v408
      %v428 = vld [vmem:[%s5] sm:$0x3]
      %v430 = vlaneseq
      %v431 = vshrl.u32 %v430, 7
      %v432 = vsub.s32 0, %v431
      %v433 = vrot.slane %v428, %v432
      %v434 = vlaneseq
      %v435 = vshrl.u32 %v434, 7
      %v436 = vsub.s32 1, %v435
      %v437 = vrot.slane %v428, %v436
      %v440 = vmul.f32 %v424, %v433
      %v441 = vmul.f32 %v420, %v437
      %v442 = vmul.f32 %v425, %v433
      %v443 = vmul.f32 %v421, %v437
      %v444 = vmul.f32 %v426, %v433
      %v445 = vmul.f32 %v422, %v437
      %v446 = vmul.f32 %v427, %v433
      %v447 = vmul.f32 %v423, %v437
      %448 = vst [vmem:[#allocation2] sm:$0xff] %v440
      %449 = vst [vmem:[#allocation2 + $0x8] sm:$0xff] %v441
      %450 = vst [vmem:[#allocation2 + $0x10] sm:$0xff] %v442
      %451 = vst [vmem:[#allocation2 + $0x18] sm:$0xff] %v443
      %452 = vst [vmem:[#allocation2 + $0x20] sm:$0xff] %v444
      %453 = vst [vmem:[#allocation2 + $0x28] sm:$0xff] %v445
      %454 = vst [vmem:[#allocation2 + $0x30] sm:$0xff] %v446
      %455 = vst [vmem:[#allocation2 + $0x38] sm:$0xff] %v447
      %456 = vrot.lane.b32.xlu0 %v393, 16
      %v457 = vpop.permute.xlu0 %456
      %458 = vrot.lane.b32.xlu0 %v395, 16
      %v459 = vpop.permute.xlu0 %458
      %460 = vrot.lane.b32.xlu0 %v397, 16
      %v461 = vpop.permute.xlu0 %460
      %462 = vrot.lane.b32.xlu0 %v399, 16
      %v463 = vpop.permute.xlu0 %462
      %464 = vrot.lane.b32.xlu0 %v394, 16
      %v465 = vpop.permute.xlu0 %464
      %466 = vrot.lane.b32.xlu0 %v396, 16
      %v467 = vpop.permute.xlu0 %466
      %468 = vrot.lane.b32.xlu0 %v398, 16
      %v469 = vpop.permute.xlu0 %468
      %470 = vrot.lane.b32.xlu0 %v400, 16
      %v471 = vpop.permute.xlu0 %470
      %vm472 = vcmp.lt.s32.totalorder %v418, 16
      %v473 = vsel %vm472, %v457, %v465
      %v474 = vsel %vm472, %v459, %v467
      %v475 = vsel %vm472, %v461, %v469
      %v476 = vsel %vm472, %v463, %v471
      %v477 = vsel %vm472, %v465, %v457
      %v478 = vsel %vm472, %v467, %v459
      %v479 = vsel %vm472, %v469, %v461
      %v480 = vsel %vm472, %v471, %v463
      %s481 = scalar_lea.vmem %s5, 2
      %v482 = vld [vmem:[%s481] sm:$0x3]
      %v484 = vlaneseq
      %v485 = vshrl.u32 %v484, 7
      %v486 = vsub.s32 0, %v485
      %v487 = vrot.slane %v482, %v486
      %v488 = vlaneseq
      %v489 = vshrl.u32 %v488, 7
      %v490 = vsub.s32 1, %v489
      %v491 = vrot.slane %v482, %v490
      %v494 = vmul.f32 %v477, %v487
      %v495 = vmul.f32 %v473, %v491
      %v496 = vmul.f32 %v478, %v487
      %v497 = vmul.f32 %v474, %v491
      %v498 = vmul.f32 %v479, %v487
      %v499 = vmul.f32 %v475, %v491
      %v500 = vmul.f32 %v480, %v487
      %v501 = vmul.f32 %v476, %v491
      %502 = vst [vmem:[#allocation2 + $0x40] sm:$0xff] %v494
      %503 = vst [vmem:[#allocation2 + $0x48] sm:$0xff] %v495
      %504 = vst [vmem:[#allocation2 + $0x50] sm:$0xff] %v496
      %505 = vst [vmem:[#allocation2 + $0x58] sm:$0xff] %v497
      %506 = vst [vmem:[#allocation2 + $0x60] sm:$0xff] %v498
      %507 = vst [vmem:[#allocation2 + $0x68] sm:$0xff] %v499
      %508 = vst [vmem:[#allocation2 + $0x70] sm:$0xff] %v500
      %509 = vst [vmem:[#allocation2 + $0x78] sm:$0xff] %v501
      %510 = vrot.lane.b32.xlu0 %v393, 15
      %v511 = vpop.permute.xlu0 %510
      %512 = vrot.lane.b32.xlu0 %v395, 15
      %v513 = vpop.permute.xlu0 %512
      %514 = vrot.lane.b32.xlu0 %v397, 15
      %v515 = vpop.permute.xlu0 %514
      %516 = vrot.lane.b32.xlu0 %v399, 15
      %v517 = vpop.permute.xlu0 %516
      %518 = vrot.lane.b32.xlu0 %v394, 15
      %v519 = vpop.permute.xlu0 %518
      %520 = vrot.lane.b32.xlu0 %v396, 15
      %v521 = vpop.permute.xlu0 %520
      %522 = vrot.lane.b32.xlu0 %v398, 15
      %v523 = vpop.permute.xlu0 %522
      %524 = vrot.lane.b32.xlu0 %v400, 15
      %v525 = vpop.permute.xlu0 %524
      %vm526 = vcmp.lt.s32.totalorder %v418, 15
      %v527 = vsel %vm526, %v511, %v519
      %v528 = vsel %vm526, %v513, %v521
      %v529 = vsel %vm526, %v515, %v523
      %v530 = vsel %vm526, %v517, %v525
      %v531 = vsel %vm526, %v519, %v511
      %v532 = vsel %vm526, %v521, %v513
      %v533 = vsel %vm526, %v523, %v515
      %v534 = vsel %vm526, %v525, %v517
      %s535 = scalar_lea.vmem %s5, 4
      %v536 = vld [vmem:[%s535] sm:$0x3]
      %v538 = vlaneseq
      %v539 = vshrl.u32 %v538, 7
      %v540 = vsub.s32 0, %v539
      %v541 = vrot.slane %v536, %v540
      %v542 = vlaneseq
      %v543 = vshrl.u32 %v542, 7
      %v544 = vsub.s32 1, %v543
      %v545 = vrot.slane %v536, %v544
      %v548 = vmul.f32 %v531, %v541
      %v549 = vmul.f32 %v527, %v545
      %v550 = vmul.f32 %v532, %v541
      %v551 = vmul.f32 %v528, %v545
      %v552 = vmul.f32 %v533, %v541
      %v553 = vmul.f32 %v529, %v545
      %v554 = vmul.f32 %v534, %v541
      %v555 = vmul.f32 %v530, %v545
      %556 = vst [vmem:[#allocation2 + $0x80] sm:$0xff] %v548
      %557 = vst [vmem:[#allocation2 + $0x88] sm:$0xff] %v549
      %558 = vst [vmem:[#allocation2 + $0x90] sm:$0xff] %v550
      %559 = vst [vmem:[#allocation2 + $0x98] sm:$0xff] %v551
      %560 = vst [vmem:[#allocation2 + $0xa0] sm:$0xff] %v552
      %561 = vst [vmem:[#allocation2 + $0xa8] sm:$0xff] %v553
      %562 = vst [vmem:[#allocation2 + $0xb0] sm:$0xff] %v554
      %563 = vst [vmem:[#allocation2 + $0xb8] sm:$0xff] %v555
      %564 = vrot.lane.b32.xlu0 %v393, 1
      %v565 = vpop.permute.xlu0 %564
      %566 = vrot.lane.b32.xlu0 %v395, 1
      %v567 = vpop.permute.xlu0 %566
      %568 = vrot.lane.b32.xlu0 %v397, 1
      %v569 = vpop.permute.xlu0 %568
      %570 = vrot.lane.b32.xlu0 %v399, 1
      %v571 = vpop.permute.xlu0 %570
      %572 = vrot.lane.b32.xlu0 %v394, 1
      %v573 = vpop.permute.xlu0 %572
      %574 = vrot.lane.b32.xlu0 %v396, 1
      %v575 = vpop.permute.xlu0 %574
      %576 = vrot.lane.b32.xlu0 %v398, 1
      %v577 = vpop.permute.xlu0 %576
      %578 = vrot.lane.b32.xlu0 %v400, 1
      %v579 = vpop.permute.xlu0 %578
      %vm580 = vcmp.lt.s32.totalorder %v418, 1
      %v581 = vsel %vm580, %v565, %v573
      %v582 = vsel %vm580, %v567, %v575
      %v583 = vsel %vm580, %v569, %v577
      %v584 = vsel %vm580, %v571, %v579
      %v585 = vsel %vm580, %v573, %v565
      %v586 = vsel %vm580, %v575, %v567
      %v587 = vsel %vm580, %v577, %v569
      %v588 = vsel %vm580, %v579, %v571
      %s589 = scalar_lea.vmem %s5, 6
      %v590 = vld [vmem:[%s589] sm:$0x3]
      %v592 = vlaneseq
      %v593 = vshrl.u32 %v592, 7
      %v594 = vsub.s32 0, %v593
      %v595 = vrot.slane %v590, %v594
      %v596 = vlaneseq
      %v597 = vshrl.u32 %v596, 7
      %v598 = vsub.s32 1, %v597
      %v599 = vrot.slane %v590, %v598
      %v602 = vmul.f32 %v585, %v595
      %v603 = vmul.f32 %v581, %v599
      %v604 = vmul.f32 %v586, %v595
      %v605 = vmul.f32 %v582, %v599
      %v606 = vmul.f32 %v587, %v595
      %v607 = vmul.f32 %v583, %v599
      %v608 = vmul.f32 %v588, %v595
      %v609 = vmul.f32 %v584, %v599
      %610 = vst [vmem:[#allocation2 + $0xc0] sm:$0xff] %v602
      %611 = vst [vmem:[#allocation2 + $0xc8] sm:$0xff] %v603
      %612 = vst [vmem:[#allocation2 + $0xd0] sm:$0xff] %v604
      %613 = vst [vmem:[#allocation2 + $0xd8] sm:$0xff] %v605
      %614 = vst [vmem:[#allocation2 + $0xe0] sm:$0xff] %v606
      %615 = vst [vmem:[#allocation2 + $0xe8] sm:$0xff] %v607
      %616 = vst [vmem:[#allocation2 + $0xf0] sm:$0xff] %v608
      %617 = vst [vmem:[#allocation2 + $0xf8] sm:$0xff] %v609
      %618 = vst [vmem:[#allocation2 + $0x100] sm:$0xff] %v393
      %619 = vst [vmem:[#allocation2 + $0x108] sm:$0xff] %v394
      %620 = vst [vmem:[#allocation2 + $0x110] sm:$0xff] %v395
      %621 = vst [vmem:[#allocation2 + $0x118] sm:$0xff] %v396
      %622 = vst [vmem:[#allocation2 + $0x120] sm:$0xff] %v397
      %623 = vst [vmem:[#allocation2 + $0x128] sm:$0xff] %v398
      %624 = vst [vmem:[#allocation2 + $0x130] sm:$0xff] %v399
      %625 = vst [vmem:[#allocation2 + $0x138] sm:$0xff] %v400
      %626 = vrot.lane.b32.xlu0 %v393, 127
      %v627 = vpop.permute.xlu0 %626
      %628 = vrot.lane.b32.xlu0 %v395, 127
      %v629 = vpop.permute.xlu0 %628
      %630 = vrot.lane.b32.xlu0 %v397, 127
      %v631 = vpop.permute.xlu0 %630
      %632 = vrot.lane.b32.xlu0 %v399, 127
      %v633 = vpop.permute.xlu0 %632
      %634 = vrot.lane.b32.xlu0 %v394, 127
      %v635 = vpop.permute.xlu0 %634
      %636 = vrot.lane.b32.xlu0 %v396, 127
      %v637 = vpop.permute.xlu0 %636
      %638 = vrot.lane.b32.xlu0 %v398, 127
      %v639 = vpop.permute.xlu0 %638
      %640 = vrot.lane.b32.xlu0 %v400, 127
      %v641 = vpop.permute.xlu0 %640
      %vm642 = vcmp.lt.s32.totalorder %v418, 127
      %v643 = vsel %vm642, %v627, %v635
      %v644 = vsel %vm642, %v629, %v637
      %v645 = vsel %vm642, %v631, %v639
      %v646 = vsel %vm642, %v633, %v641
      %v647 = vsel %vm642, %v635, %v627
      %v648 = vsel %vm642, %v637, %v629
      %v649 = vsel %vm642, %v639, %v631
      %v650 = vsel %vm642, %v641, %v633
      %s651 = scalar_lea.vmem %s5, 10
      %v652 = vld [vmem:[%s651] sm:$0x3]
      %v654 = vlaneseq
      %v655 = vshrl.u32 %v654, 7
      %v656 = vsub.s32 0, %v655
      %v657 = vrot.slane %v652, %v656
      %v658 = vlaneseq
      %v659 = vshrl.u32 %v658, 7
      %v660 = vsub.s32 1, %v659
      %v661 = vrot.slane %v652, %v660
      %v664 = vmul.f32 %v643, %v657
      %v665 = vmul.f32 %v647, %v661
      %v666 = vmul.f32 %v644, %v657
      %v667 = vmul.f32 %v648, %v661
      %v668 = vmul.f32 %v645, %v657
      %v669 = vmul.f32 %v649, %v661
      %v670 = vmul.f32 %v646, %v657
      %v671 = vmul.f32 %v650, %v661
      %672 = vst [vmem:[#allocation2 + $0x140] sm:$0xff] %v664
      %673 = vst [vmem:[#allocation2 + $0x148] sm:$0xff] %v665
      %674 = vst [vmem:[#allocation2 + $0x150] sm:$0xff] %v666
      %675 = vst [vmem:[#allocation2 + $0x158] sm:$0xff] %v667
      %676 = vst [vmem:[#allocation2 + $0x160] sm:$0xff] %v668
      %677 = vst [vmem:[#allocation2 + $0x168] sm:$0xff] %v669
      %678 = vst [vmem:[#allocation2 + $0x170] sm:$0xff] %v670
      %679 = vst [vmem:[#allocation2 + $0x178] sm:$0xff] %v671
      %680 = vrot.lane.b32.xlu0 %v393, 113
      %v681 = vpop.permute.xlu0 %680
      %682 = vrot.lane.b32.xlu0 %v395, 113
      %v683 = vpop.permute.xlu0 %682
      %684 = vrot.lane.b32.xlu0 %v397, 113
      %v685 = vpop.permute.xlu0 %684
      %686 = vrot.lane.b32.xlu0 %v399, 113
      %v687 = vpop.permute.xlu0 %686
      %688 = vrot.lane.b32.xlu0 %v394, 113
      %v689 = vpop.permute.xlu0 %688
      %690 = vrot.lane.b32.xlu0 %v396, 113
      %v691 = vpop.permute.xlu0 %690
      %692 = vrot.lane.b32.xlu0 %v398, 113
      %v693 = vpop.permute.xlu0 %692
      %694 = vrot.lane.b32.xlu0 %v400, 113
      %v695 = vpop.permute.xlu0 %694
      %vm696 = vcmp.lt.s32.totalorder %v418, 113
      %v697 = vsel %vm696, %v681, %v689
      %v698 = vsel %vm696, %v683, %v691
      %v699 = vsel %vm696, %v685, %v693
      %v700 = vsel %vm696, %v687, %v695
      %v701 = vsel %vm696, %v689, %v681
      %v702 = vsel %vm696, %v691, %v683
      %v703 = vsel %vm696, %v693, %v685
      %v704 = vsel %vm696, %v695, %v687
      %s705 = scalar_lea.vmem %s5, 12
      %v706 = vld [vmem:[%s705] sm:$0x3]
      %v708 = vlaneseq
      %v709 = vshrl.u32 %v708, 7
      %v710 = vsub.s32 0, %v709
      %v711 = vrot.slane %v706, %v710
      %v712 = vlaneseq
      %v713 = vshrl.u32 %v712, 7
      %v714 = vsub.s32 1, %v713
      %v715 = vrot.slane %v706, %v714
      %v718 = vmul.f32 %v697, %v711
      %v719 = vmul.f32 %v701, %v715
      %v720 = vmul.f32 %v698, %v711
      %v721 = vmul.f32 %v702, %v715
      %v722 = vmul.f32 %v699, %v711
      %v723 = vmul.f32 %v703, %v715
      %v724 = vmul.f32 %v700, %v711
      %v725 = vmul.f32 %v704, %v715
      %726 = vst [vmem:[#allocation2 + $0x180] sm:$0xff] %v718
      %727 = vst [vmem:[#allocation2 + $0x188] sm:$0xff] %v719
      %728 = vst [vmem:[#allocation2 + $0x190] sm:$0xff] %v720
      %729 = vst [vmem:[#allocation2 + $0x198] sm:$0xff] %v721
      %730 = vst [vmem:[#allocation2 + $0x1a0] sm:$0xff] %v722
      %731 = vst [vmem:[#allocation2 + $0x1a8] sm:$0xff] %v723
      %732 = vst [vmem:[#allocation2 + $0x1b0] sm:$0xff] %v724
      %733 = vst [vmem:[#allocation2 + $0x1b8] sm:$0xff] %v725
      %734 = vrot.lane.b32.xlu0 %v393, 112
      %v735 = vpop.permute.xlu0 %734
      %736 = vrot.lane.b32.xlu0 %v395, 112
      %v737 = vpop.permute.xlu0 %736
      %738 = vrot.lane.b32.xlu0 %v397, 112
      %v739 = vpop.permute.xlu0 %738
      %740 = vrot.lane.b32.xlu0 %v399, 112
      %v741 = vpop.permute.xlu0 %740
      %742 = vrot.lane.b32.xlu0 %v394, 112
      %v743 = vpop.permute.xlu0 %742
      %744 = vrot.lane.b32.xlu0 %v396, 112
      %v745 = vpop.permute.xlu0 %744
      %746 = vrot.lane.b32.xlu0 %v398, 112
      %v747 = vpop.permute.xlu0 %746
      %748 = vrot.lane.b32.xlu0 %v400, 112
      %v749 = vpop.permute.xlu0 %748
      %vm750 = vcmp.lt.s32.totalorder %v418, 112
      %v751 = vsel %vm750, %v735, %v743
      %v752 = vsel %vm750, %v737, %v745
      %v753 = vsel %vm750, %v739, %v747
      %v754 = vsel %vm750, %v741, %v749
      %v755 = vsel %vm750, %v743, %v735
      %v756 = vsel %vm750, %v745, %v737
      %v757 = vsel %vm750, %v747, %v739
      %v758 = vsel %vm750, %v749, %v741
      %s759 = scalar_lea.vmem %s5, 14
      %v760 = vld [vmem:[%s759] sm:$0x3]
      %v762 = vlaneseq
      %v763 = vshrl.u32 %v762, 7
      %v764 = vsub.s32 0, %v763
      %v765 = vrot.slane %v760, %v764
      %v766 = vlaneseq
      %v767 = vshrl.u32 %v766, 7
      %v768 = vsub.s32 1, %v767
      %v769 = vrot.slane %v760, %v768
      %v772 = vmul.f32 %v751, %v765
      %v773 = vmul.f32 %v755, %v769
      %v774 = vmul.f32 %v752, %v765
      %v775 = vmul.f32 %v756, %v769
      %v776 = vmul.f32 %v753, %v765
      %v777 = vmul.f32 %v757, %v769
      %v778 = vmul.f32 %v754, %v765
      %v779 = vmul.f32 %v758, %v769
      %780 = vst [vmem:[#allocation2 + $0x1c0] sm:$0xff] %v772
      %781 = vst [vmem:[#allocation2 + $0x1c8] sm:$0xff] %v773
      %782 = vst [vmem:[#allocation2 + $0x1d0] sm:$0xff] %v774
      %783 = vst [vmem:[#allocation2 + $0x1d8] sm:$0xff] %v775
      %784 = vst [vmem:[#allocation2 + $0x1e0] sm:$0xff] %v776
      %785 = vst [vmem:[#allocation2 + $0x1e8] sm:$0xff] %v777
      %786 = vst [vmem:[#allocation2 + $0x1f0] sm:$0xff] %v778
      %787 = vst [vmem:[#allocation2 + $0x1f8] sm:$0xff] %v779
      %788 = vrot.lane.b32.xlu0 %v393, 111
      %v789 = vpop.permute.xlu0 %788
      %790 = vrot.lane.b32.xlu0 %v395, 111
      %v791 = vpop.permute.xlu0 %790
      %792 = vrot.lane.b32.xlu0 %v397, 111
      %v793 = vpop.permute.xlu0 %792
      %794 = vrot.lane.b32.xlu0 %v399, 111
      %v795 = vpop.permute.xlu0 %794
      %796 = vrot.lane.b32.xlu0 %v394, 111
      %v797 = vpop.permute.xlu0 %796
      %798 = vrot.lane.b32.xlu0 %v396, 111
      %v799 = vpop.permute.xlu0 %798
      %800 = vrot.lane.b32.xlu0 %v398, 111
      %v801 = vpop.permute.xlu0 %800
      %802 = vrot.lane.b32.xlu0 %v400, 111
      %v803 = vpop.permute.xlu0 %802
      %vm804 = vcmp.lt.s32.totalorder %v418, 111
      %v805 = vsel %vm804, %v789, %v797
      %v806 = vsel %vm804, %v791, %v799
      %v807 = vsel %vm804, %v793, %v801
      %v808 = vsel %vm804, %v795, %v803
      %v809 = vsel %vm804, %v797, %v789
      %v810 = vsel %vm804, %v799, %v791
      %v811 = vsel %vm804, %v801, %v793
      %v812 = vsel %vm804, %v803, %v795
      %s813 = scalar_lea.vmem %s5, 16
      %v814 = vld [vmem:[%s813] sm:$0x3]
      %v816 = vlaneseq
      %v817 = vshrl.u32 %v816, 7
      %v818 = vsub.s32 0, %v817
      %v819 = vrot.slane %v814, %v818
      %v820 = vlaneseq
      %v821 = vshrl.u32 %v820, 7
      %v822 = vsub.s32 1, %v821
      %v823 = vrot.slane %v814, %v822
      %v826 = vmul.f32 %v805, %v819
      %v827 = vmul.f32 %v809, %v823
      %v828 = vmul.f32 %v806, %v819
      %v829 = vmul.f32 %v810, %v823
      %v830 = vmul.f32 %v807, %v819
      %v831 = vmul.f32 %v811, %v823
      %v832 = vmul.f32 %v808, %v819
      %v833 = vmul.f32 %v812, %v823
      %834 = vst [vmem:[#allocation2 + $0x200] sm:$0xff] %v826
      %835 = vst [vmem:[#allocation2 + $0x208] sm:$0xff] %v827
      %836 = vst [vmem:[#allocation2 + $0x210] sm:$0xff] %v828
      %837 = vst [vmem:[#allocation2 + $0x218] sm:$0xff] %v829
      %838 = vst [vmem:[#allocation2 + $0x220] sm:$0xff] %v830
      %839 = vst [vmem:[#allocation2 + $0x228] sm:$0xff] %v831
      %840 = vst [vmem:[#allocation2 + $0x230] sm:$0xff] %v832
      %841 = vst [vmem:[#allocation2 + $0x238] sm:$0xff] %v833
      %v842 = vld [vmem:[%s3] sm:$0xff]
      %v843 = vld [vmem:[%s3 + $0x8] sm:$0xff]
      %v844 = vld [vmem:[%s3 + $0x10] sm:$0xff]
      %v845 = vld [vmem:[#allocation2] sm:$0xff]
      %v846 = vld [vmem:[#allocation2 + $0x8] sm:$0xff]
      %v847 = vld [vmem:[#allocation2 + $0x10] sm:$0xff]
      %v848 = vld [vmem:[#allocation2 + $0x18] sm:$0xff]
      %v849 = vld [vmem:[#allocation2 + $0x20] sm:$0xff]
      %v850 = vld [vmem:[#allocation2 + $0x28] sm:$0xff]
      %v851 = vld [vmem:[#allocation2 + $0x30] sm:$0xff]
      %v852 = vld [vmem:[#allocation2 + $0x38] sm:$0xff]
      %v853 = vld [vmem:[#allocation2 + $0x40] sm:$0xff]
      %v854 = vld [vmem:[#allocation2 + $0x48] sm:$0xff]
      %v855 = vld [vmem:[#allocation2 + $0x50] sm:$0xff]
      %v856 = vld [vmem:[#allocation2 + $0x58] sm:$0xff]
      %v857 = vld [vmem:[#allocation2 + $0x60] sm:$0xff]
      %v858 = vld [vmem:[#allocation2 + $0x68] sm:$0xff]
      %v859 = vld [vmem:[#allocation2 + $0x70] sm:$0xff]
      %v860 = vld [vmem:[#allocation2 + $0x78] sm:$0xff]
      %v861 = vld [vmem:[#allocation2 + $0x80] sm:$0xff]
      %v862 = vld [vmem:[#allocation2 + $0x88] sm:$0xff]
      %v863 = vld [vmem:[#allocation2 + $0x90] sm:$0xff]
      %v864 = vld [vmem:[#allocation2 + $0x98] sm:$0xff]
      %v865 = vld [vmem:[#allocation2 + $0xa0] sm:$0xff]
      %v866 = vld [vmem:[#allocation2 + $0xa8] sm:$0xff]
      %v867 = vld [vmem:[#allocation2 + $0xb0] sm:$0xff]
      %v868 = vld [vmem:[#allocation2 + $0xb8] sm:$0xff]
      %v869 = vld [vmem:[#allocation2 + $0xc0] sm:$0xff]
      %v870 = vld [vmem:[#allocation2 + $0xc8] sm:$0xff]
      %v871 = vld [vmem:[#allocation2 + $0xd0] sm:$0xff]
      %v872 = vld [vmem:[#allocation2 + $0xd8] sm:$0xff]
      %v873 = vld [vmem:[#allocation2 + $0xe0] sm:$0xff]
      %v874 = vld [vmem:[#allocation2 + $0xe8] sm:$0xff]
      %v875 = vld [vmem:[#allocation2 + $0xf0] sm:$0xff]
      %v876 = vld [vmem:[#allocation2 + $0xf8] sm:$0xff]
      %v877 = vld [vmem:[#allocation2 + $0x100] sm:$0xff]
      %v878 = vld [vmem:[#allocation2 + $0x108] sm:$0xff]
      %v879 = vld [vmem:[#allocation2 + $0x110] sm:$0xff]
      %v880 = vld [vmem:[#allocation2 + $0x118] sm:$0xff]
      %v881 = vld [vmem:[#allocation2 + $0x120] sm:$0xff]
      %v882 = vld [vmem:[#allocation2 + $0x128] sm:$0xff]
      %v883 = vld [vmem:[#allocation2 + $0x130] sm:$0xff]
      %v884 = vld [vmem:[#allocation2 + $0x138] sm:$0xff]
      %v885 = vld [vmem:[#allocation2 + $0x140] sm:$0xff]
      %v886 = vld [vmem:[#allocation2 + $0x148] sm:$0xff]
      %v887 = vld [vmem:[#allocation2 + $0x150] sm:$0xff]
      %v888 = vld [vmem:[#allocation2 + $0x158] sm:$0xff]
      %v889 = vld [vmem:[#allocation2 + $0x160] sm:$0xff]
      %v890 = vld [vmem:[#allocation2 + $0x168] sm:$0xff]
      %v891 = vld [vmem:[#allocation2 + $0x170] sm:$0xff]
      %v892 = vld [vmem:[#allocation2 + $0x178] sm:$0xff]
      %v893 = vld [vmem:[#allocation2 + $0x180] sm:$0xff]
      %v894 = vld [vmem:[#allocation2 + $0x188] sm:$0xff]
      %v895 = vld [vmem:[#allocation2 + $0x190] sm:$0xff]
      %v896 = vld [vmem:[#allocation2 + $0x198] sm:$0xff]
      %v897 = vld [vmem:[#allocation2 + $0x1a0] sm:$0xff]
      %v898 = vld [vmem:[#allocation2 + $0x1a8] sm:$0xff]
      %v899 = vld [vmem:[#allocation2 + $0x1b0] sm:$0xff]
      %v900 = vld [vmem:[#allocation2 + $0x1b8] sm:$0xff]
      %v901 = vld [vmem:[#allocation2 + $0x1c0] sm:$0xff]
      %v902 = vld [vmem:[#allocation2 + $0x1c8] sm:$0xff]
      %v903 = vld [vmem:[#allocation2 + $0x1d0] sm:$0xff]
      %v904 = vld [vmem:[#allocation2 + $0x1d8] sm:$0xff]
      %v905 = vld [vmem:[#allocation2 + $0x1e0] sm:$0xff]
      %v906 = vld [vmem:[#allocation2 + $0x1e8] sm:$0xff]
      %v907 = vld [vmem:[#allocation2 + $0x1f0] sm:$0xff]
      %v908 = vld [vmem:[#allocation2 + $0x1f8] sm:$0xff]
      %v909 = vld [vmem:[#allocation2 + $0x200] sm:$0xff]
      %v910 = vld [vmem:[#allocation2 + $0x208] sm:$0xff]
      %v911 = vld [vmem:[#allocation2 + $0x210] sm:$0xff]
      %v912 = vld [vmem:[#allocation2 + $0x218] sm:$0xff]
      %v913 = vld [vmem:[#allocation2 + $0x220] sm:$0xff]
      %v914 = vld [vmem:[#allocation2 + $0x228] sm:$0xff]
      %v915 = vld [vmem:[#allocation2 + $0x230] sm:$0xff]
      %v916 = vld [vmem:[#allocation2 + $0x238] sm:$0xff]
      %v917 = vld [vmem:[%s4] sm:$0xff]
      %919 = vset.pattern.permute.xlu0 0
      %920 = vperm.xlu0 %919, %v917
      %v921 = vpop.permute.xlu0 %920
      %vm923 = vcmask 261120
      %v925 = vsel %vm923, %v844, 0
      %927 = vmatprep.subr.mxu0 %v846
      %928 = vmatpush1.msra.mxu0 %v845
      %929 = vmatprep.subr.mxu0 %v848
      %930 = vmatpush1.msra.mxu0 %v847
      %931 = vmatprep.subr.mxu0 %v850
      %932 = vmatpush1.msra.mxu0 %v849
      %933 = vmatprep.subr.mxu0 %v852
      %934 = vmatpush1.msra.mxu0 %v851
      %935 = vmatprep.subr.mxu0 %v854
      %936 = vmatpush1.msra.mxu0 %v853
      %937 = vmatprep.subr.mxu0 %v856
      %938 = vmatpush1.msra.mxu0 %v855
      %939 = vmatprep.subr.mxu0 %v858
      %940 = vmatpush1.msra.mxu0 %v857
      %941 = vmatprep.subr.mxu0 %v860
      %942 = vmatpush1.msra.mxu0 %v859
      %943 = vmatprep.subr.mxu0 %v862
      %944 = vmatpush1.msra.mxu0 %v861
      %945 = vmatprep.subr.mxu0 %v864
      %946 = vmatpush1.msra.mxu0 %v863
      %947 = vmatprep.subr.mxu0 %v866
      %948 = vmatpush1.msra.mxu0 %v865
      %949 = vmatprep.subr.mxu0 %v868
      %950 = vmatpush1.msra.mxu0 %v867
      %951 = vmatprep.subr.mxu0 %v870
      %952 = vmatpush1.msra.mxu0 %v869
      %953 = vmatprep.subr.mxu0 %v872
      %954 = vmatpush1.msra.mxu0 %v871
      %955 = vmatprep.subr.mxu0 %v874
      %956 = vmatpush1.msra.mxu0 %v873
      %957 = vmatprep.subr.mxu0 %v876
      %958 = vmatpush1.msra.mxu0 %v875
      %959 = vmatprep.subr.mxu0 %v878
      %960 = vmatpush1.msra.mxu0 %v877
      %961 = vmatprep.subr.mxu0 %v880
      %962 = vmatpush1.msra.mxu0 %v879
      %963 = vmatprep.subr.mxu0 %v882
      %964 = vmatpush1.msra.mxu0 %v881
      %965 = vmatprep.subr.mxu0 %v884
      %966 = vmatpush1.msra.mxu0 %v883
      %967 = vmatprep.subr.mxu0 %v886
      %968 = vmatpush1.msra.mxu0 %v885
      %969 = vmatprep.subr.mxu0 %v888
      %970 = vmatpush1.msra.mxu0 %v887
      %971 = vmatprep.subr.mxu0 %v890
      %972 = vmatpush1.msra.mxu0 %v889
      %973 = vmatprep.subr.mxu0 %v892
      %974 = vmatpush1.msra.mxu0 %v891
      %975 = vmatprep.subr.mxu0 %v894
      %976 = vmatpush1.msra.mxu0 %v893
      %977 = vmatprep.subr.mxu0 %v896
      %978 = vmatpush1.msra.mxu0 %v895
      %979 = vmatprep.subr.mxu0 %v898
      %980 = vmatpush1.msra.mxu0 %v897
      %981 = vmatprep.subr.mxu0 %v900
      %982 = vmatpush1.msra.mxu0 %v899
      %983 = vmatprep.subr.mxu0 %v902
      %984 = vmatpush1.msra.mxu0 %v901
      %985 = vmatprep.subr.mxu0 %v904
      %986 = vmatpush1.msra.mxu0 %v903
      %987 = vmatprep.subr.mxu0 %v906
      %988 = vmatpush1.msra.mxu0 %v905
      %989 = vmatprep.subr.mxu0 %v908
      %990 = vmatpush1.msra.mxu0 %v907
      %991 = vmatprep.mubr.f32.mxu0 %v843
      %992 = vmatmul.mubr.f32.gmra.mrb[0].mxu0 %v842
      %v993 = vpop.f32.mrb[0].mxu0
      %v994 = vadd.f32 %v921, %v993
      %v995 = vpop.f32.mrb[0].mxu0
      %v996 = vadd.f32 %v921, %v995
      %997 = vdwg.mxu0
      %998 = vmatprep.subr.mxu0 %v910
      %999 = vmatpush1.msra.mxu0 %v909
      %1000 = vmatprep.subr.mxu0 %v912
      %1001 = vmatpush1.msra.mxu0 %v911
      %1002 = vmatprep.subr.mxu0 %v914
      %1003 = vmatpush1.msra.mxu0 %v913
      %1004 = vmatprep.subr.mxu0 %v916
      %1005 = vmatpush1.msra.mxu0 %v915
      %1006 = vmatprep.subr.mxu0 0.0
      %1007 = vmatpush1.msra.mxu0 0.0
      %1008 = vmatprep.subr.mxu0 0.0
      %1009 = vmatpush1.msra.mxu0 0.0
      %1010 = vmatprep.subr.mxu0 0.0
      %1011 = vmatpush1.msra.mxu0 0.0
      %1012 = vmatprep.subr.mxu0 0.0
      %1013 = vmatpush1.msra.mxu0 0.0
      %1014 = vmatprep.subr.mxu0 0.0
      %1015 = vmatpush1.msra.mxu0 0.0
      %1016 = vmatprep.subr.mxu0 0.0
      %1017 = vmatpush1.msra.mxu0 0.0
      %1018 = vmatprep.subr.mxu0 0.0
      %1019 = vmatpush1.msra.mxu0 0.0
      %1020 = vmatprep.subr.mxu0 0.0
      %1021 = vmatpush1.msra.mxu0 0.0
      %1022 = vmatprep.subr.mxu0 0.0
      %1023 = vmatpush1.msra.mxu0 0.0
      %1024 = vmatprep.subr.mxu0 0.0
      %1025 = vmatpush1.msra.mxu0 0.0
      %1026 = vmatprep.subr.mxu0 0.0
      %1027 = vmatpush1.msra.mxu0 0.0
      %1028 = vmatprep.subr.mxu0 0.0
      %1029 = vmatpush1.msra.mxu0 0.0
      %1030 = vmatprep.subr.mxu0 0.0
      %1031 = vmatpush1.msra.mxu0 0.0
      %1032 = vmatprep.subr.mxu0 0.0
      %1033 = vmatpush1.msra.mxu0 0.0
      %1034 = vmatprep.subr.mxu0 0.0
      %1035 = vmatpush1.msra.mxu0 0.0
      %1036 = vmatprep.subr.mxu0 0.0
      %1037 = vmatpush1.msra.mxu0 0.0
      %1038 = vmatprep.subr.mxu0 0.0
      %1039 = vmatpush1.msra.mxu0 0.0
      %1040 = vmatprep.subr.mxu0 0.0
      %1041 = vmatpush1.msra.mxu0 0.0
      %1042 = vmatprep.subr.mxu0 0.0
      %1043 = vmatpush1.msra.mxu0 0.0
      %1044 = vmatprep.subr.mxu0 0.0
      %1045 = vmatpush1.msra.mxu0 0.0
      %1046 = vmatprep.subr.mxu0 0.0
      %1047 = vmatpush1.msra.mxu0 0.0
      %1048 = vmatprep.subr.mxu0 0.0
      %1049 = vmatpush1.msra.mxu0 0.0
      %1050 = vmatprep.subr.mxu0 0.0
      %1051 = vmatpush1.msra.mxu0 0.0
      %1052 = vmatprep.subr.mxu0 0.0
      %1053 = vmatpush1.msra.mxu0 0.0
      %1054 = vmatprep.subr.mxu0 0.0
      %1055 = vmatpush1.msra.mxu0 0.0
      %1056 = vmatprep.subr.mxu0 0.0
      %1057 = vmatpush1.msra.mxu0 0.0
      %1058 = vmatprep.subr.mxu0 0.0
      %1059 = vmatpush1.msra.mxu0 0.0
      %1060 = vmatprep.subr.mxu0 0.0
      %1061 = vmatpush1.msra.mxu0 0.0
      %1062 = vmatprep.mubr.f32.mxu0 0.0
      %1063 = vmatmul.mubr.f32.gmra.mrb[0].mxu0 %v925
      %v1064 = vpop.f32.mrb[0].mxu0
      %v1065 = vadd.f32 %v994, %v1064
      %v1066 = vpop.f32.mrb[0].mxu0
      %v1067 = vadd.f32 %v996, %v1066
      %1068 = vdwg.mxu0
      %v1069 = vmax.f32 %v1065, 0.0
      %v1070 = vmax.f32 %v1067, 0.0
      %v1073 = vrot.slane %v1069, 4
      %v1074 = vrot.slane %v1070, 4
      %1077 = vst [vmem:[%s251] sm:$0xf0] %v1073
      %1078 = vst [vmem:[%s251 + $0x8] sm:$0xf0] %v1074
      %1079 = vst [vmem:[%s251 + $0x10] sm:$0xf] %v1073
      %1080 = vst [vmem:[%s251 + $0x18] sm:$0xf] %v1074
      %p1081 = scmp.lt.s32.totalorder %s17, 1
      %s1082 = scalar_select %p1081, %s17, 1
      %s1083 = smul.addr %s1082, 4
      %s1084 = smul.addr %s1083, 8
      %s1085 = scalar_lea.vmem %s6, %s1084
      // Predicated region
      $region45: #{bottleneck_forward.1} parent=43 // pred_check
        %p1086 = pneg %p166
      $region46: #{bottleneck_forward.1} parent=43 // pred_check_branch
        %1088 = sbr.rel (%p1086) target = $region48
      $region47: #{bottleneck_forward.1} parent=43 // pred_region
        _
      $region48: #{bottleneck_forward.1} parent=43 // pred_fallthru
        _
    $region44: #{bottleneck_forward.1} parent=5 // pred_fallthru
      _
    %p1089 = scmp.le.s32.totalorder 2, %s12
    // Predicated region
    $region49: #{bottleneck_forward.1} parent=5 // pred_check
      %p1090 = pneg %p1089
    $region50: #{bottleneck_forward.1} parent=5 // pred_check_branch
      %1092 = sbr.rel (%p1090) target = $region52
    $region51: #{bottleneck_forward.1} parent=5 // pred_region
      %s1093 = ssub.s32 %s12, 2
      // Predicated region
      $region53: #{bottleneck_forward.1} parent=51 // pred_check
        %p1094 = pneg %p172
      $region54: #{bottleneck_forward.1} parent=51 // pred_check_branch
        %1096 = sbr.rel (%p1094) target = $region56
      $region55: #{bottleneck_forward.1} parent=51 // pred_region
        %p1097 = scmp.lt.s32.totalorder %s18, 1
        %s1098 = scalar_select %p1097, %s18, 1
        %s1099 = smul.addr %s1098, 4
        %s1100 = smul.addr %s1099, 8
        %s1101 = scalar_lea.vmem %s6, %s1100
      $region56: #{bottleneck_forward.1} parent=51 // pred_fallthru
        _
    $region52: #{bottleneck_forward.1} parent=5 // pred_fallthru
      _
  $region6: #{bottleneck_forward.1} parent=0 // loop_footer
    %s16 = sadd.s32 1, %s12
  $region7: #{bottleneck_forward.1} parent=0 // loop_footer_branch
    %11 = sbr.rel target = $region3
  $region8: #{bottleneck_forward.1} parent=0 // loop_exit
    _

</llo_original>
